<compile_context>
chip_gen: v5e
topology: v5e:2x2
jax: 0.10.0
libtpu: 0.0.40
codegen_flags: <defaults>
</compile_context>

<pallas_src>
import functools

import jax
import jax.numpy as jnp
from jax import lax
from jax.experimental import pallas as pl
from jax.experimental.pallas import tpu as pltpu


def _mhsa_kernel(x_ref, wq_ref, bq_ref, wk_ref, bk_ref, wv_ref, bv_ref,
                 wo_ref, bo_ref, o_ref, *, head: int):
    S, H = x_ref.shape[1], x_ref.shape[2]
    dh = H // head

    xb = x_ref[0].astype(jnp.bfloat16)                     # (S, H) bf16 MXU operand

    # Full-width, lane-dense projections: bf16 operands, f32 accumulation.
    # The 1/sqrt(H) softmax scale is already folded into wq/bq host-side.
    q = jnp.dot(xb, wq_ref[...], preferred_element_type=jnp.float32) + bq_ref[...]
    k = jnp.dot(xb, wk_ref[...], preferred_element_type=jnp.float32) + bk_ref[...]
    v = jnp.dot(xb, wv_ref[...], preferred_element_type=jnp.float32) + bv_ref[...]

    qb = q.astype(jnp.bfloat16)
    kb = k.astype(jnp.bfloat16)
    vb = v.astype(jnp.bfloat16)

    head_outs = []
    for h in range(head):                                  # static unroll (compile-time)
        sl = slice(h * dh, (h + 1) * dh)
        qh, kh, vh = qb[:, sl], kb[:, sl], vb[:, sl]       # (S, dh) static lane slices

        # scores = q_h @ k_h^T, contracting the last axis of BOTH operands so
        # the MXU consumes K in its native layout (no XLU transpose).
        scores = lax.dot_general(
            qh, kh,
            dimension_numbers=(((1,), (1,)), ((), ())),
            preferred_element_type=jnp.float32)            # (S, S) f32

        # Numerically-stable softmax, strictly f32.
        m = jnp.max(scores, axis=-1, keepdims=True)
        e = jnp.exp(scores - m)
        s = jnp.sum(e, axis=-1, keepdims=True)
        r = pl.reciprocal(s, approx=True)                  # EUP slot
        r = r * (2.0 - s * r)                              # one Newton step -> near exact
        p = (e * r).astype(jnp.bfloat16)

        head_outs.append(
            jnp.dot(p, vh, preferred_element_type=jnp.float32))   # (S, dh)

    # Lane-dense (S, H) slab of per-head outputs, then one full-depth output
    # projection (K = H) on the MXU.
    attn = jnp.concatenate(head_outs, axis=-1).astype(jnp.bfloat16)   # (S, H)
    out = jnp.dot(attn, wo_ref[...], preferred_element_type=jnp.float32) + bo_ref[...]

    o_ref[0] = out.astype(o_ref.dtype)
    # TODO(synk): nn.Dropout is identity in eval mode; training-mode random
    # dropout is not applied here.


def multi_head_self_attention(x, params, *, head: int):
    """x: (B, S, H) float32.  params: dict of (in,out) weights and (1,H) biases."""
    B, S, H = x.shape
    assert H % head == 0, "hidden_dim must be divisible by head"
    dh = H // head
    scale = 1.0 / (H ** 0.5)        # reference scales by sqrt(hidden_dim)

    # Host-side parameter prep (fuses with the cast, essentially free):
    #   * softmax scale folded into Wq and bq,
    #   * weights cast to bf16 (MXU operands); biases stay f32 (added post-MXU).
    wq = (params["wq"] * scale).astype(jnp.bfloat16)
    bq = (params["bq"] * scale).astype(jnp.float32)
    wk = params["wk"].astype(jnp.bfloat16)
    bk = params["bk"].astype(jnp.float32)
    wv = params["wv"].astype(jnp.bfloat16)
    bv = params["bv"].astype(jnp.float32)
    wo = params["wo"].astype(jnp.bfloat16)
    bo = params["bo"].astype(jnp.float32)

    kernel = functools.partial(_mhsa_kernel, head=head)

    x_spec = pl.BlockSpec((1, S, H), lambda b: (b, 0, 0))
    # Constant block index -> weights/biases DMA'd once, VMEM-resident across grid.
    w_spec = pl.BlockSpec((H, H), lambda b: (0, 0))
    b_spec = pl.BlockSpec((1, H), lambda b: (0, 0))
    out_spec = pl.BlockSpec((1, S, H), lambda b: (b, 0, 0))

    # Advisory cost estimate for XLA's scheduler around the fused custom call.
    flops = 8 * B * S * H * H + 4 * B * S * S * H
    transcendentals = B * head * S * S
    bytes_accessed = (4 * 2 * B * S * H          # x in + out (f32)
                      + 2 * 4 * H * H            # 4 weight matrices, bf16, loaded once
                      + 4 * 4 * H)               # 4 biases, f32

    return pl.pallas_call(
        kernel,
        out_shape=jax.ShapeDtypeStruct((B, S, H), x.dtype),
        grid_spec=pltpu.PrefetchScalarGridSpec(
            num_scalar_prefetch=0,
            grid=(B,),
            in_specs=[
                x_spec,            # x
                w_spec, b_spec,    # q
                w_spec, b_spec,    # k
                w_spec, b_spec,    # v
                w_spec, b_spec,    # o
            ],
            out_specs=out_spec,
        ),
        compiler_params=pltpu.CompilerParams(
            dimension_semantics=("parallel",)),
        cost_estimate=pl.CostEstimate(
            flops=flops,
            transcendentals=transcendentals,
            bytes_accessed=bytes_accessed),
    )(x, wq, bq, wk, bk, wv, bv, wo, bo)


def _reference(x, params, head):
    """Pure-JAX f32 reference mirroring the PyTorch forward (eval mode)."""
    B, S, H = x.shape
    dh = H // head
    sqrt_d = H ** 0.5

    def lin(x, w, b):
        return x @ w + b  # w already (in, out)

    q = lin(x, params["wq"], params["bq"]).reshape(B, S, head, dh).transpose(0, 2, 1, 3)
    k = lin(x, params["wk"], params["bk"]).reshape(B, S, head, dh).transpose(0, 2, 1, 3)
    v = lin(x, params["wv"], params["bv"]).reshape(B, S, head, dh).transpose(0, 2, 1, 3)
    score = jax.nn.softmax(jnp.einsum("bhif,bhjf->bhij", q, k) / sqrt_d, axis=-1)
    attn = jnp.einsum("bhij,bhjf->bihf", score, v).reshape(B, S, H)
    return lin(attn, params["wo"], params["bo"])


if __name__ == "__main__":
    B, S, H, HEAD = 2, 8, 32, 4

    key = jax.random.PRNGKey(0)
    keys = jax.random.split(key, 9)

    # Deterministic synthetic parameters (weights stored as (in, out)).
    params = {
        "wq": jax.random.normal(keys[0], (H, H), jnp.float32) * 0.05,
        "bq": jax.random.normal(keys[1], (1, H), jnp.float32) * 0.01,
        "wk": jax.random.normal(keys[2], (H, H), jnp.float32) * 0.05,
        "bk": jax.random.normal(keys[3], (1, H), jnp.float32) * 0.01,
        "wv": jax.random.normal(keys[4], (H, H), jnp.float32) * 0.05,
        "bv": jax.random.normal(keys[5], (1, H), jnp.float32) * 0.01,
        "wo": jax.random.normal(keys[6], (H, H), jnp.float32) * 0.05,
        "bo": jax.random.normal(keys[7], (1, H), jnp.float32) * 0.01,
    }
    x = jax.random.normal(keys[8], (B, S, H), jnp.float32)

    out = multi_head_self_attention(x, params, head=HEAD)
    out = jax.block_until_ready(out)

    ref = _reference(x, params, HEAD)
    assert out.shape == (B, S, H)
    # Tolerance reflects bf16 MXU operands (f32 accumulation, f32 softmax)
    # compared against an all-f32 reference.
    assert jnp.allclose(out, ref, atol=1e-2, rtol=1e-2), "mismatch vs reference"

    print("KERNEL_OK")
</pallas_src>

<mosaic_0001>
module attributes {stable_mosaic.version = 11 : i64} {
  func.func @_mhsa_kernel(%arg0: i32, %arg1: memref<1x8x32xf32, #tpu.memory_space<vmem>>, %arg2: memref<32x32xbf16, #tpu.memory_space<vmem>>, %arg3: memref<1x32xf32, #tpu.memory_space<vmem>>, %arg4: memref<32x32xbf16, #tpu.memory_space<vmem>>, %arg5: memref<1x32xf32, #tpu.memory_space<vmem>>, %arg6: memref<32x32xbf16, #tpu.memory_space<vmem>>, %arg7: memref<1x32xf32, #tpu.memory_space<vmem>>, %arg8: memref<32x32xbf16, #tpu.memory_space<vmem>>, %arg9: memref<1x32xf32, #tpu.memory_space<vmem>>, %arg10: memref<1x8x32xf32, #tpu.memory_space<vmem>>) attributes {dimension_semantics = [#tpu.dimension_semantics<parallel>], iteration_bounds = array<i64: 2>, scalar_prefetch = 0 : i64, scratch_operands = 0 : i64, tpu.core_type = #tpu.core_type<tc>, window_params = [{transform_indices = @transform_0, window_bounds = array<i64: 1, 8, 32>}, {pipeline_mode = #tpu.pipeline_mode<synchronous>, transform_indices = @transform_1, window_bounds = array<i64: 32, 32>}, {pipeline_mode = #tpu.pipeline_mode<synchronous>, transform_indices = @transform_2, window_bounds = array<i64: 1, 32>}, {pipeline_mode = #tpu.pipeline_mode<synchronous>, transform_indices = @transform_3, window_bounds = array<i64: 32, 32>}, {pipeline_mode = #tpu.pipeline_mode<synchronous>, transform_indices = @transform_4, window_bounds = array<i64: 1, 32>}, {pipeline_mode = #tpu.pipeline_mode<synchronous>, transform_indices = @transform_5, window_bounds = array<i64: 32, 32>}, {pipeline_mode = #tpu.pipeline_mode<synchronous>, transform_indices = @transform_6, window_bounds = array<i64: 1, 32>}, {pipeline_mode = #tpu.pipeline_mode<synchronous>, transform_indices = @transform_7, window_bounds = array<i64: 32, 32>}, {pipeline_mode = #tpu.pipeline_mode<synchronous>, transform_indices = @transform_8, window_bounds = array<i64: 1, 32>}, {transform_indices = @transform_9, window_bounds = array<i64: 1, 8, 32>}]} {
    %c0 = arith.constant 0 : index
    %c0_0 = arith.constant 0 : index
    %c0_1 = arith.constant 0 : index
    %0 = vector.load %arg1[%c0, %c0_0, %c0_1] : memref<1x8x32xf32, #tpu.memory_space<vmem>>, vector<1x8x32xf32>
    %1 = vector.shape_cast %0 : vector<1x8x32xf32> to vector<8x32xf32>
    %2 = arith.truncf %1 : vector<8x32xf32> to vector<8x32xbf16>
    %c0_2 = arith.constant 0 : index
    %c0_3 = arith.constant 0 : index
    %3 = vector.load %arg2[%c0_2, %c0_3] : memref<32x32xbf16, #tpu.memory_space<vmem>>, vector<32x32xbf16>
    %cst = arith.constant dense<0.000000e+00> : vector<8x32xf32>
    %4 = tpu.matmul %2, %3, %cst {dimension_numbers = #tpu.dot_dimension_numbers<[1], [0], [0], [1], [0, 0, 1, 1], [], []>} : vector<8x32xbf16>, vector<32x32xbf16>, vector<8x32xf32> -> vector<8x32xf32>
    %c0_4 = arith.constant 0 : index
    %c0_5 = arith.constant 0 : index
    %5 = vector.load %arg3[%c0_4, %c0_5] : memref<1x32xf32, #tpu.memory_space<vmem>>, vector<1x32xf32>
    %6 = vector.broadcast %5 : vector<1x32xf32> to vector<8x32xf32>
    %7 = arith.addf %4, %6 : vector<8x32xf32>
    %c0_6 = arith.constant 0 : index
    %c0_7 = arith.constant 0 : index
    %8 = vector.load %arg4[%c0_6, %c0_7] : memref<32x32xbf16, #tpu.memory_space<vmem>>, vector<32x32xbf16>
    %cst_8 = arith.constant dense<0.000000e+00> : vector<8x32xf32>
    %9 = tpu.matmul %2, %8, %cst_8 {dimension_numbers = #tpu.dot_dimension_numbers<[1], [0], [0], [1], [0, 0, 1, 1], [], []>} : vector<8x32xbf16>, vector<32x32xbf16>, vector<8x32xf32> -> vector<8x32xf32>
    %c0_9 = arith.constant 0 : index
    %c0_10 = arith.constant 0 : index
    %10 = vector.load %arg5[%c0_9, %c0_10] : memref<1x32xf32, #tpu.memory_space<vmem>>, vector<1x32xf32>
    %11 = vector.broadcast %10 : vector<1x32xf32> to vector<8x32xf32>
    %12 = arith.addf %9, %11 : vector<8x32xf32>
    %c0_11 = arith.constant 0 : index
    %c0_12 = arith.constant 0 : index
    %13 = vector.load %arg6[%c0_11, %c0_12] : memref<32x32xbf16, #tpu.memory_space<vmem>>, vector<32x32xbf16>
    %cst_13 = arith.constant dense<0.000000e+00> : vector<8x32xf32>
    %14 = tpu.matmul %2, %13, %cst_13 {dimension_numbers = #tpu.dot_dimension_numbers<[1], [0], [0], [1], [0, 0, 1, 1], [], []>} : vector<8x32xbf16>, vector<32x32xbf16>, vector<8x32xf32> -> vector<8x32xf32>
    %c0_14 = arith.constant 0 : index
    %c0_15 = arith.constant 0 : index
    %15 = vector.load %arg7[%c0_14, %c0_15] : memref<1x32xf32, #tpu.memory_space<vmem>>, vector<1x32xf32>
    %16 = vector.broadcast %15 : vector<1x32xf32> to vector<8x32xf32>
    %17 = arith.addf %14, %16 : vector<8x32xf32>
    %18 = arith.truncf %7 : vector<8x32xf32> to vector<8x32xbf16>
    %19 = arith.truncf %12 : vector<8x32xf32> to vector<8x32xbf16>
    %20 = arith.truncf %17 : vector<8x32xf32> to vector<8x32xbf16>
    %21 = vector.extract_strided_slice %18 {offsets = [0, 0], sizes = [8, 8], strides = [1, 1]} : vector<8x32xbf16> to vector<8x8xbf16>
    %22 = vector.extract_strided_slice %19 {offsets = [0, 0], sizes = [8, 8], strides = [1, 1]} : vector<8x32xbf16> to vector<8x8xbf16>
    %23 = vector.extract_strided_slice %20 {offsets = [0, 0], sizes = [8, 8], strides = [1, 1]} : vector<8x32xbf16> to vector<8x8xbf16>
    %cst_16 = arith.constant dense<0.000000e+00> : vector<8x8xf32>
    %24 = tpu.matmul %21, %22, %cst_16 {dimension_numbers = #tpu.dot_dimension_numbers<[1], [1], [0], [0], [0, 0, 1, 0], [], []>} : vector<8x8xbf16>, vector<8x8xbf16>, vector<8x8xf32> -> vector<8x8xf32>
    %cst_17 = arith.constant dense<0xFF800000> : vector<8xf32>
    %25 = vector.multi_reduction <maximumf>, %24, %cst_17 [1] : vector<8x8xf32> to vector<8xf32>
    %26 = vector.shape_cast %25 : vector<8xf32> to vector<8x1xf32>
    %27 = vector.broadcast %26 : vector<8x1xf32> to vector<8x8xf32>
    %28 = arith.subf %24, %27 : vector<8x8xf32>
    %29 = math.exp %28 : vector<8x8xf32>
    %cst_18 = arith.constant dense<0.000000e+00> : vector<8xf32>
    %30 = vector.multi_reduction <add>, %29, %cst_18 [1] : vector<8x8xf32> to vector<8xf32>
    %31 = vector.shape_cast %30 : vector<8xf32> to vector<8x1xf32>
    %32 = tpu.reciprocal %31 {approx = true} : vector<8x1xf32> -> vector<8x1xf32>
    %33 = arith.mulf %31, %32 : vector<8x1xf32>
    %cst_19 = arith.constant 2.000000e+00 : f32
    %34 = vector.broadcast %cst_19 : f32 to vector<8x1xf32>
    %35 = arith.subf %34, %33 : vector<8x1xf32>
    %36 = arith.mulf %32, %35 : vector<8x1xf32>
    %37 = vector.broadcast %36 : vector<8x1xf32> to vector<8x8xf32>
    %38 = arith.mulf %29, %37 : vector<8x8xf32>
    %39 = arith.truncf %38 : vector<8x8xf32> to vector<8x8xbf16>
    %cst_20 = arith.constant dense<0.000000e+00> : vector<8x8xf32>
    %40 = tpu.matmul %39, %23, %cst_20 {dimension_numbers = #tpu.dot_dimension_numbers<[1], [0], [0], [1], [0, 0, 1, 1], [], []>} : vector<8x8xbf16>, vector<8x8xbf16>, vector<8x8xf32> -> vector<8x8xf32>
    %41 = vector.extract_strided_slice %18 {offsets = [0, 8], sizes = [8, 8], strides = [1, 1]} : vector<8x32xbf16> to vector<8x8xbf16>
    %42 = vector.extract_strided_slice %19 {offsets = [0, 8], sizes = [8, 8], strides = [1, 1]} : vector<8x32xbf16> to vector<8x8xbf16>
    %43 = vector.extract_strided_slice %20 {offsets = [0, 8], sizes = [8, 8], strides = [1, 1]} : vector<8x32xbf16> to vector<8x8xbf16>
    %cst_21 = arith.constant dense<0.000000e+00> : vector<8x8xf32>
    %44 = tpu.matmul %41, %42, %cst_21 {dimension_numbers = #tpu.dot_dimension_numbers<[1], [1], [0], [0], [0, 0, 1, 0], [], []>} : vector<8x8xbf16>, vector<8x8xbf16>, vector<8x8xf32> -> vector<8x8xf32>
    %cst_22 = arith.constant dense<0xFF800000> : vector<8xf32>
    %45 = vector.multi_reduction <maximumf>, %44, %cst_22 [1] : vector<8x8xf32> to vector<8xf32>
    %46 = vector.shape_cast %45 : vector<8xf32> to vector<8x1xf32>
    %47 = vector.broadcast %46 : vector<8x1xf32> to vector<8x8xf32>
    %48 = arith.subf %44, %47 : vector<8x8xf32>
    %49 = math.exp %48 : vector<8x8xf32>
    %cst_23 = arith.constant dense<0.000000e+00> : vector<8xf32>
    %50 = vector.multi_reduction <add>, %49, %cst_23 [1] : vector<8x8xf32> to vector<8xf32>
    %51 = vector.shape_cast %50 : vector<8xf32> to vector<8x1xf32>
    %52 = tpu.reciprocal %51 {approx = true} : vector<8x1xf32> -> vector<8x1xf32>
    %53 = arith.mulf %51, %52 : vector<8x1xf32>
    %cst_24 = arith.constant 2.000000e+00 : f32
    %54 = vector.broadcast %cst_24 : f32 to vector<8x1xf32>
    %55 = arith.subf %54, %53 : vector<8x1xf32>
    %56 = arith.mulf %52, %55 : vector<8x1xf32>
    %57 = vector.broadcast %56 : vector<8x1xf32> to vector<8x8xf32>
    %58 = arith.mulf %49, %57 : vector<8x8xf32>
    %59 = arith.truncf %58 : vector<8x8xf32> to vector<8x8xbf16>
    %cst_25 = arith.constant dense<0.000000e+00> : vector<8x8xf32>
    %60 = tpu.matmul %59, %43, %cst_25 {dimension_numbers = #tpu.dot_dimension_numbers<[1], [0], [0], [1], [0, 0, 1, 1], [], []>} : vector<8x8xbf16>, vector<8x8xbf16>, vector<8x8xf32> -> vector<8x8xf32>
    %61 = vector.extract_strided_slice %18 {offsets = [0, 16], sizes = [8, 8], strides = [1, 1]} : vector<8x32xbf16> to vector<8x8xbf16>
    %62 = vector.extract_strided_slice %19 {offsets = [0, 16], sizes = [8, 8], strides = [1, 1]} : vector<8x32xbf16> to vector<8x8xbf16>
    %63 = vector.extract_strided_slice %20 {offsets = [0, 16], sizes = [8, 8], strides = [1, 1]} : vector<8x32xbf16> to vector<8x8xbf16>
    %cst_26 = arith.constant dense<0.000000e+00> : vector<8x8xf32>
    %64 = tpu.matmul %61, %62, %cst_26 {dimension_numbers = #tpu.dot_dimension_numbers<[1], [1], [0], [0], [0, 0, 1, 0], [], []>} : vector<8x8xbf16>, vector<8x8xbf16>, vector<8x8xf32> -> vector<8x8xf32>
    %cst_27 = arith.constant dense<0xFF800000> : vector<8xf32>
    %65 = vector.multi_reduction <maximumf>, %64, %cst_27 [1] : vector<8x8xf32> to vector<8xf32>
    %66 = vector.shape_cast %65 : vector<8xf32> to vector<8x1xf32>
    %67 = vector.broadcast %66 : vector<8x1xf32> to vector<8x8xf32>
    %68 = arith.subf %64, %67 : vector<8x8xf32>
    %69 = math.exp %68 : vector<8x8xf32>
    %cst_28 = arith.constant dense<0.000000e+00> : vector<8xf32>
    %70 = vector.multi_reduction <add>, %69, %cst_28 [1] : vector<8x8xf32> to vector<8xf32>
    %71 = vector.shape_cast %70 : vector<8xf32> to vector<8x1xf32>
    %72 = tpu.reciprocal %71 {approx = true} : vector<8x1xf32> -> vector<8x1xf32>
    %73 = arith.mulf %71, %72 : vector<8x1xf32>
    %cst_29 = arith.constant 2.000000e+00 : f32
    %74 = vector.broadcast %cst_29 : f32 to vector<8x1xf32>
    %75 = arith.subf %74, %73 : vector<8x1xf32>
    %76 = arith.mulf %72, %75 : vector<8x1xf32>
    %77 = vector.broadcast %76 : vector<8x1xf32> to vector<8x8xf32>
    %78 = arith.mulf %69, %77 : vector<8x8xf32>
    %79 = arith.truncf %78 : vector<8x8xf32> to vector<8x8xbf16>
    %cst_30 = arith.constant dense<0.000000e+00> : vector<8x8xf32>
    %80 = tpu.matmul %79, %63, %cst_30 {dimension_numbers = #tpu.dot_dimension_numbers<[1], [0], [0], [1], [0, 0, 1, 1], [], []>} : vector<8x8xbf16>, vector<8x8xbf16>, vector<8x8xf32> -> vector<8x8xf32>
    %81 = vector.extract_strided_slice %18 {offsets = [0, 24], sizes = [8, 8], strides = [1, 1]} : vector<8x32xbf16> to vector<8x8xbf16>
    %82 = vector.extract_strided_slice %19 {offsets = [0, 24], sizes = [8, 8], strides = [1, 1]} : vector<8x32xbf16> to vector<8x8xbf16>
    %83 = vector.extract_strided_slice %20 {offsets = [0, 24], sizes = [8, 8], strides = [1, 1]} : vector<8x32xbf16> to vector<8x8xbf16>
    %cst_31 = arith.constant dense<0.000000e+00> : vector<8x8xf32>
    %84 = tpu.matmul %81, %82, %cst_31 {dimension_numbers = #tpu.dot_dimension_numbers<[1], [1], [0], [0], [0, 0, 1, 0], [], []>} : vector<8x8xbf16>, vector<8x8xbf16>, vector<8x8xf32> -> vector<8x8xf32>
    %cst_32 = arith.constant dense<0xFF800000> : vector<8xf32>
    %85 = vector.multi_reduction <maximumf>, %84, %cst_32 [1] : vector<8x8xf32> to vector<8xf32>
    %86 = vector.shape_cast %85 : vector<8xf32> to vector<8x1xf32>
    %87 = vector.broadcast %86 : vector<8x1xf32> to vector<8x8xf32>
    %88 = arith.subf %84, %87 : vector<8x8xf32>
    %89 = math.exp %88 : vector<8x8xf32>
    %cst_33 = arith.constant dense<0.000000e+00> : vector<8xf32>
    %90 = vector.multi_reduction <add>, %89, %cst_33 [1] : vector<8x8xf32> to vector<8xf32>
    %91 = vector.shape_cast %90 : vector<8xf32> to vector<8x1xf32>
    %92 = tpu.reciprocal %91 {approx = true} : vector<8x1xf32> -> vector<8x1xf32>
    %93 = arith.mulf %91, %92 : vector<8x1xf32>
    %cst_34 = arith.constant 2.000000e+00 : f32
    %94 = vector.broadcast %cst_34 : f32 to vector<8x1xf32>
    %95 = arith.subf %94, %93 : vector<8x1xf32>
    %96 = arith.mulf %92, %95 : vector<8x1xf32>
    %97 = vector.broadcast %96 : vector<8x1xf32> to vector<8x8xf32>
    %98 = arith.mulf %89, %97 : vector<8x8xf32>
    %99 = arith.truncf %98 : vector<8x8xf32> to vector<8x8xbf16>
    %cst_35 = arith.constant dense<0.000000e+00> : vector<8x8xf32>
    %100 = tpu.matmul %99, %83, %cst_35 {dimension_numbers = #tpu.dot_dimension_numbers<[1], [0], [0], [1], [0, 0, 1, 1], [], []>} : vector<8x8xbf16>, vector<8x8xbf16>, vector<8x8xf32> -> vector<8x8xf32>
    %101 = tpu.concatenate %40, %60, %80, %100 in 1 : vector<8x8xf32>, vector<8x8xf32>, vector<8x8xf32>, vector<8x8xf32> -> vector<8x32xf32>
    %102 = arith.truncf %101 : vector<8x32xf32> to vector<8x32xbf16>
    %c0_36 = arith.constant 0 : index
    %c0_37 = arith.constant 0 : index
    %103 = vector.load %arg8[%c0_36, %c0_37] : memref<32x32xbf16, #tpu.memory_space<vmem>>, vector<32x32xbf16>
    %cst_38 = arith.constant dense<0.000000e+00> : vector<8x32xf32>
    %104 = tpu.matmul %102, %103, %cst_38 {dimension_numbers = #tpu.dot_dimension_numbers<[1], [0], [0], [1], [0, 0, 1, 1], [], []>} : vector<8x32xbf16>, vector<32x32xbf16>, vector<8x32xf32> -> vector<8x32xf32>
    %c0_39 = arith.constant 0 : index
    %c0_40 = arith.constant 0 : index
    %105 = vector.load %arg9[%c0_39, %c0_40] : memref<1x32xf32, #tpu.memory_space<vmem>>, vector<1x32xf32>
    %106 = vector.broadcast %105 : vector<1x32xf32> to vector<8x32xf32>
    %107 = arith.addf %104, %106 : vector<8x32xf32>
    %c0_41 = arith.constant 0 : index
    %c0_42 = arith.constant 0 : index
    %c0_43 = arith.constant 0 : index
    %108 = vector.load %arg10[%c0_41, %c0_42, %c0_43] : memref<1x8x32xf32, #tpu.memory_space<vmem>>, vector<1x8x32xf32>
    %109 = vector.shape_cast %108 : vector<1x8x32xf32> to vector<8x32xf32>
    %110 = vector.shape_cast %107 : vector<8x32xf32> to vector<1x8x32xf32>
    tpu.vector_store %arg10[%c0_41, %c0_42, %c0_43], %110 {strides = array<i32>} : memref<1x8x32xf32, #tpu.memory_space<vmem>>, vector<1x8x32xf32>,
    return
  }
  func.func @transform_0(%arg0: i32) -> (i32, i32, i32) {
    %c0_i32 = arith.constant 0 : i32
    %c0_i32_0 = arith.constant 0 : i32
    %c0_i32_1 = arith.constant 0 : i32
    return %arg0, %c0_i32, %c0_i32_0 : i32, i32, i32
  }
  func.func @transform_1(%arg0: i32) -> (i32, i32) {
    %c0_i32 = arith.constant 0 : i32
    %c0_i32_0 = arith.constant 0 : i32
    %c0_i32_1 = arith.constant 0 : i32
    return %c0_i32, %c0_i32_0 : i32, i32
  }
  func.func @transform_2(%arg0: i32) -> (i32, i32) {
    %c0_i32 = arith.constant 0 : i32
    %c0_i32_0 = arith.constant 0 : i32
    %c0_i32_1 = arith.constant 0 : i32
    return %c0_i32, %c0_i32_0 : i32, i32
  }
  func.func @transform_3(%arg0: i32) -> (i32, i32) {
    %c0_i32 = arith.constant 0 : i32
    %c0_i32_0 = arith.constant 0 : i32
    %c0_i32_1 = arith.constant 0 : i32
    return %c0_i32, %c0_i32_0 : i32, i32
  }
  func.func @transform_4(%arg0: i32) -> (i32, i32) {
    %c0_i32 = arith.constant 0 : i32
    %c0_i32_0 = arith.constant 0 : i32
    %c0_i32_1 = arith.constant 0 : i32
    return %c0_i32, %c0_i32_0 : i32, i32
  }
  func.func @transform_5(%arg0: i32) -> (i32, i32) {
    %c0_i32 = arith.constant 0 : i32
    %c0_i32_0 = arith.constant 0 : i32
    %c0_i32_1 = arith.constant 0 : i32
    return %c0_i32, %c0_i32_0 : i32, i32
  }
  func.func @transform_6(%arg0: i32) -> (i32, i32) {
    %c0_i32 = arith.constant 0 : i32
    %c0_i32_0 = arith.constant 0 : i32
    %c0_i32_1 = arith.constant 0 : i32
    return %c0_i32, %c0_i32_0 : i32, i32
  }
  func.func @transform_7(%arg0: i32) -> (i32, i32) {
    %c0_i32 = arith.constant 0 : i32
    %c0_i32_0 = arith.constant 0 : i32
    %c0_i32_1 = arith.constant 0 : i32
    return %c0_i32, %c0_i32_0 : i32, i32
  }
  func.func @transform_8(%arg0: i32) -> (i32, i32) {
    %c0_i32 = arith.constant 0 : i32
    %c0_i32_0 = arith.constant 0 : i32
    %c0_i32_1 = arith.constant 0 : i32
    return %c0_i32, %c0_i32_0 : i32, i32
  }
  func.func @transform_9(%arg0: i32) -> (i32, i32, i32) {
    %c0_i32 = arith.constant 0 : i32
    %c0_i32_0 = arith.constant 0 : i32
    %c0_i32_1 = arith.constant 0 : i32
    return %arg0, %c0_i32, %c0_i32_0 : i32, i32, i32
  }
}

</mosaic_0001>

<llo_original>
// kernel: tpu_custom_call.1
$region0: #{tpu_custom_call.1}
  #allocation0 [shape = 'u32[]', space=smem, size = 0x4, offset = 0x4, fixed_abs, tag = 'smem constant byte address 0x4 - core index']
  #allocation1 [shape = 'u32[72,128]{1,0:T(1,128)}', space=vmem, size = 0x9000, scoped, tag = 'internal scratch']
  %s0 = inlined_call_operand.hbm [shape: f32[2,8,32], index: 0, kind: input, shape index: {}]
  %s1 = inlined_call_operand.hbm [shape: bf16[32,32], index: 1, kind: input, shape index: {}]
  %s2 = inlined_call_operand.vmem [shape: f32[1,32], index: 2, kind: input, shape index: {}]
  %s3 = inlined_call_operand.hbm [shape: bf16[32,32], index: 3, kind: input, shape index: {}]
  %s4 = inlined_call_operand.vmem [shape: f32[1,32], index: 4, kind: input, shape index: {}]
  %s5 = inlined_call_operand.hbm [shape: bf16[32,32], index: 5, kind: input, shape index: {}]
  %s6 = inlined_call_operand.vmem [shape: f32[1,32], index: 6, kind: input, shape index: {}]
  %s7 = inlined_call_operand.hbm [shape: bf16[32,32], index: 7, kind: input, shape index: {}]
  %s8 = inlined_call_operand.vmem [shape: f32[1,32], index: 8, kind: input, shape index: {}]
  %s9 = inlined_call_operand.hbm [shape: f32[2,8,32], index: 9, kind: output, shape index: {}]
  %s10 = sld [smem:[#allocation0]]
  $region89: #{tpu_custom_call.1} parent=0
    _
  %s12 = ssub.s32 1, %s10
  %s13 = scalar_select 0, %s12, %s10
  $region1: #{tpu_custom_call.1} parent=0
    #allocation2 [shape = 'u8[8192]{0}', space=vmem, size = 0x2000, scoped, tag = 'input window, operand 0']
    #allocation3 [shape = 's32[2]{0}', space=sflag, size = 0x8, scoped, tag = 'scoped memory for tpu_custom_call.1']
    #allocation4 [shape = 's32[2]{0}', space=sflag, size = 0x8, scoped, tag = 'scoped memory for tpu_custom_call.1']
    #allocation5 [shape = 'u8[8192]{0}', space=vmem, size = 0x2000, scoped, tag = 'input window, operand 1, single buffered']
    #allocation6 [shape = 's32[1]{0}', space=sflag, size = 0x4, scoped, tag = 'scoped memory for tpu_custom_call.1']
    #allocation7 [shape = 'u8[8192]{0}', space=vmem, size = 0x2000, scoped, tag = 'input window, operand 3, single buffered']
    #allocation8 [shape = 'u8[8192]{0}', space=vmem, size = 0x2000, scoped, tag = 'input window, operand 5, single buffered']
    #allocation9 [shape = 's32[1]{0}', space=sflag, size = 0x4, scoped, tag = 'scoped memory for tpu_custom_call.1']
    #allocation10 [shape = 'u8[8192]{0}', space=vmem, size = 0x2000, scoped, tag = 'input window, operand 7, single buffered']
    #allocation11 [shape = 'u8[8192]{0}', space=vmem, size = 0x2000, scoped, tag = 'output window, operand 0']
    %14 = vsyncpa [#allocation3], 0
    %s15 = scalar_lea.sflag [#allocation3], 1
    %16 = vsyncpa %s15, 0
    %17 = vsyncpa [#allocation6], 0
    %18 = vsyncpa [#allocation9], 0
    %19 = vsyncpa [#allocation4], 0
    %s20 = scalar_lea.sflag [#allocation4], 1
    %21 = vsyncpa %s20, 0
    loop: start=0, step=1, limit=4
    $region2: #{tpu_custom_call.1} parent=1 // loop_pre_header
      _
    $region3: #{tpu_custom_call.1} parent=1 // loop_header
      %s23 = sphi 0, %s27
      %p24 = scmp.ge.s32.totalorder %s23, 4
      %s33 = sphi 0, %s35
      %s36 = sphi 0, %s33
      %s37 = sphi 0, %s36
      %s53 = sphi 0, %s37
      %s57 = sphi 0, %s57
      %s59 = sphi 0, %s57
      %s60 = sphi 0, %s59
      %s74 = sphi 0, %s60
      %s78 = sphi 0, %s78
      %s80 = sphi 0, %s78
      %s81 = sphi 0, %s80
      %s95 = sphi 0, %s81
      %s99 = sphi 0, %s99
      %s101 = sphi 0, %s99
      %s102 = sphi 0, %s101
      %s116 = sphi 0, %s102
      %s120 = sphi 0, %s120
      %s122 = sphi 0, %s120
      %s123 = sphi 0, %s122
      %s137 = sphi 0, %s123
      %s141 = sphi 0, %s141
      %s143 = sphi 0, %s141
      %s144 = sphi 0, %s143
      %s158 = sphi 0, %s144
      %s162 = sphi 0, %s162
      %s164 = sphi 0, %s162
      %s165 = sphi 0, %s164
      %s179 = sphi 0, %s165
      %s183 = sphi 0, %s183
      %s185 = sphi 0, %s183
      %s186 = sphi 0, %s185
      %s200 = sphi 0, %s186
      %s204 = sphi 0, %s204
      %s206 = sphi 0, %s204
      %s207 = sphi 0, %s206
      %s221 = sphi 0, %s207
      %s227 = sphi 0, %s229
      %s230 = sphi 0, %s227
      %s231 = sphi 0, %s230
      %s247 = sphi 0, %s231
    $region4: #{tpu_custom_call.1} parent=1 // loop_header_branch
      %26 = sbr.rel (%p24) target = $region8
    $region5: #{tpu_custom_call.1} parent=1 // loop_body
      %s28 = ssub.s32 %s23, 1
      %s29 = ssub.s32 %s23, 2
      %s30 = sadd.s32 %s23, 1
      %s31 = ssub.s32 %s23, %s30
      %p32 = scmp.eq.s32.totalorder %s31, 0
      %s34 = sadd.s32 %s33, 1
      %s35 = scalar_select %p32, %s33, %s34
      %p38 = pneg %p32
      %p39 = scmp.eq.s32.totalorder %s23, 1
      %p40 = por %p38, %p39
      %p41 = scmp.ne.s32.totalorder %s33, %s36
      %p42 = scmp.eq.s32.totalorder %s23, 0
      %p43 = por %p41, %p42
      %p44 = scmp.ne.s32.totalorder %s33, %s36
      %p45 = scmp.eq.s32.totalorder %s28, 1
      %p46 = por %p44, %p45
      %p47 = scmp.ne.s32.totalorder %s36, %s37
      %p48 = scmp.eq.s32.totalorder %s28, 0
      %p49 = por %p47, %p48
      %p50 = scmp.ne.s32.totalorder %s36, %s37
      %p51 = scmp.eq.s32.totalorder %s29, 1
      %p52 = por %p50, %p51
      %p54 = scmp.ne.s32.totalorder %s37, %s53
      %p55 = scmp.eq.s32.totalorder %s29, 0
      %p56 = por %p54, %p55
      %s58 = sadd.s32 %s57, 1
      %p61 = scmp.eq.s32.totalorder %s23, 1
      %p62 = scmp.ne.s32.totalorder %s57, %s59
      %p63 = scmp.eq.s32.totalorder %s23, 0
      %p64 = por %p62, %p63
      %p65 = scmp.ne.s32.totalorder %s57, %s59
      %p66 = scmp.eq.s32.totalorder %s28, 1
      %p67 = por %p65, %p66
      %p68 = scmp.ne.s32.totalorder %s59, %s60
      %p69 = scmp.eq.s32.totalorder %s28, 0
      %p70 = por %p68, %p69
      %p71 = scmp.ne.s32.totalorder %s59, %s60
      %p72 = scmp.eq.s32.totalorder %s29, 1
      %p73 = por %p71, %p72
      %p75 = scmp.ne.s32.totalorder %s60, %s74
      %p76 = scmp.eq.s32.totalorder %s29, 0
      %p77 = por %p75, %p76
      %s79 = sadd.s32 %s78, 1
      %p82 = scmp.eq.s32.totalorder %s23, 1
      %p83 = scmp.ne.s32.totalorder %s78, %s80
      %p84 = scmp.eq.s32.totalorder %s23, 0
      %p85 = por %p83, %p84
      %p86 = scmp.ne.s32.totalorder %s78, %s80
      %p87 = scmp.eq.s32.totalorder %s28, 1
      %p88 = por %p86, %p87
      %p89 = scmp.ne.s32.totalorder %s80, %s81
      %p90 = scmp.eq.s32.totalorder %s28, 0
      %p91 = por %p89, %p90
      %p92 = scmp.ne.s32.totalorder %s80, %s81
      %p93 = scmp.eq.s32.totalorder %s29, 1
      %p94 = por %p92, %p93
      %p96 = scmp.ne.s32.totalorder %s81, %s95
      %p97 = scmp.eq.s32.totalorder %s29, 0
      %p98 = por %p96, %p97
      %s100 = sadd.s32 %s99, 1
      %p103 = scmp.eq.s32.totalorder %s23, 1
      %p104 = scmp.ne.s32.totalorder %s99, %s101
      %p105 = scmp.eq.s32.totalorder %s23, 0
      %p106 = por %p104, %p105
      %p107 = scmp.ne.s32.totalorder %s99, %s101
      %p108 = scmp.eq.s32.totalorder %s28, 1
      %p109 = por %p107, %p108
      %p110 = scmp.ne.s32.totalorder %s101, %s102
      %p111 = scmp.eq.s32.totalorder %s28, 0
      %p112 = por %p110, %p111
      %p113 = scmp.ne.s32.totalorder %s101, %s102
      %p114 = scmp.eq.s32.totalorder %s29, 1
      %p115 = por %p113, %p114
      %p117 = scmp.ne.s32.totalorder %s102, %s116
      %p118 = scmp.eq.s32.totalorder %s29, 0
      %p119 = por %p117, %p118
      %s121 = sadd.s32 %s120, 1
      %p124 = scmp.eq.s32.totalorder %s23, 1
      %p125 = scmp.ne.s32.totalorder %s120, %s122
      %p126 = scmp.eq.s32.totalorder %s23, 0
      %p127 = por %p125, %p126
      %p128 = scmp.ne.s32.totalorder %s120, %s122
      %p129 = scmp.eq.s32.totalorder %s28, 1
      %p130 = por %p128, %p129
      %p131 = scmp.ne.s32.totalorder %s122, %s123
      %p132 = scmp.eq.s32.totalorder %s28, 0
      %p133 = por %p131, %p132
      %p134 = scmp.ne.s32.totalorder %s122, %s123
      %p135 = scmp.eq.s32.totalorder %s29, 1
      %p136 = por %p134, %p135
      %p138 = scmp.ne.s32.totalorder %s123, %s137
      %p139 = scmp.eq.s32.totalorder %s29, 0
      %p140 = por %p138, %p139
      %s142 = sadd.s32 %s141, 1
      %p145 = scmp.eq.s32.totalorder %s23, 1
      %p146 = scmp.ne.s32.totalorder %s141, %s143
      %p147 = scmp.eq.s32.totalorder %s23, 0
      %p148 = por %p146, %p147
      %p149 = scmp.ne.s32.totalorder %s141, %s143
      %p150 = scmp.eq.s32.totalorder %s28, 1
      %p151 = por %p149, %p150
      %p152 = scmp.ne.s32.totalorder %s143, %s144
      %p153 = scmp.eq.s32.totalorder %s28, 0
      %p154 = por %p152, %p153
      %p155 = scmp.ne.s32.totalorder %s143, %s144
      %p156 = scmp.eq.s32.totalorder %s29, 1
      %p157 = por %p155, %p156
      %p159 = scmp.ne.s32.totalorder %s144, %s158
      %p160 = scmp.eq.s32.totalorder %s29, 0
      %p161 = por %p159, %p160
      %s163 = sadd.s32 %s162, 1
      %p166 = scmp.eq.s32.totalorder %s23, 1
      %p167 = scmp.ne.s32.totalorder %s162, %s164
      %p168 = scmp.eq.s32.totalorder %s23, 0
      %p169 = por %p167, %p168
      %p170 = scmp.ne.s32.totalorder %s162, %s164
      %p171 = scmp.eq.s32.totalorder %s28, 1
      %p172 = por %p170, %p171
      %p173 = scmp.ne.s32.totalorder %s164, %s165
      %p174 = scmp.eq.s32.totalorder %s28, 0
      %p175 = por %p173, %p174
      %p176 = scmp.ne.s32.totalorder %s164, %s165
      %p177 = scmp.eq.s32.totalorder %s29, 1
      %p178 = por %p176, %p177
      %p180 = scmp.ne.s32.totalorder %s165, %s179
      %p181 = scmp.eq.s32.totalorder %s29, 0
      %p182 = por %p180, %p181
      %s184 = sadd.s32 %s183, 1
      %p187 = scmp.eq.s32.totalorder %s23, 1
      %p188 = scmp.ne.s32.totalorder %s183, %s185
      %p189 = scmp.eq.s32.totalorder %s23, 0
      %p190 = por %p188, %p189
      %p191 = scmp.ne.s32.totalorder %s183, %s185
      %p192 = scmp.eq.s32.totalorder %s28, 1
      %p193 = por %p191, %p192
      %p194 = scmp.ne.s32.totalorder %s185, %s186
      %p195 = scmp.eq.s32.totalorder %s28, 0
      %p196 = por %p194, %p195
      %p197 = scmp.ne.s32.totalorder %s185, %s186
      %p198 = scmp.eq.s32.totalorder %s29, 1
      %p199 = por %p197, %p198
      %p201 = scmp.ne.s32.totalorder %s186, %s200
      %p202 = scmp.eq.s32.totalorder %s29, 0
      %p203 = por %p201, %p202
      %s205 = sadd.s32 %s204, 1
      %p208 = scmp.eq.s32.totalorder %s23, 1
      %p209 = scmp.ne.s32.totalorder %s204, %s206
      %p210 = scmp.eq.s32.totalorder %s23, 0
      %p211 = por %p209, %p210
      %p212 = scmp.ne.s32.totalorder %s204, %s206
      %p213 = scmp.eq.s32.totalorder %s28, 1
      %p214 = por %p212, %p213
      %p215 = scmp.ne.s32.totalorder %s206, %s207
      %p216 = scmp.eq.s32.totalorder %s28, 0
      %p217 = por %p215, %p216
      %p218 = scmp.ne.s32.totalorder %s206, %s207
      %p219 = scmp.eq.s32.totalorder %s29, 1
      %p220 = por %p218, %p219
      %p222 = scmp.ne.s32.totalorder %s207, %s221
      %p223 = scmp.eq.s32.totalorder %s29, 0
      %p224 = por %p222, %p223
      %s225 = ssub.s32 %s23, %s30
      %p226 = scmp.eq.s32.totalorder %s225, 0
      %s228 = sadd.s32 %s227, 1
      %s229 = scalar_select %p226, %s227, %s228
      %p232 = pneg %p226
      %p233 = scmp.eq.s32.totalorder %s23, 1
      %p234 = por %p232, %p233
      %p235 = scmp.ne.s32.totalorder %s227, %s230
      %p236 = scmp.eq.s32.totalorder %s23, 0
      %p237 = por %p235, %p236
      %p238 = scmp.ne.s32.totalorder %s227, %s230
      %p239 = scmp.eq.s32.totalorder %s28, 1
      %p240 = por %p238, %p239
      %p241 = scmp.ne.s32.totalorder %s230, %s231
      %p242 = scmp.eq.s32.totalorder %s28, 0
      %p243 = por %p241, %p242
      %p244 = scmp.ne.s32.totalorder %s230, %s231
      %p245 = scmp.eq.s32.totalorder %s29, 1
      %p246 = por %p244, %p245
      %p248 = scmp.ne.s32.totalorder %s231, %s247
      %p249 = scmp.eq.s32.totalorder %s29, 0
      %p250 = por %p248, %p249
      %p251 = scmp.le.s32.totalorder 1, %s23
      %p252 = scmp.lt.s32.totalorder %s23, 3
      %p253 = pnand %p251, %p252
      %p254 = pneg %p253
      // Predicated region
      $region9: #{tpu_custom_call.1} parent=5 // pred_check
        _
      $region10: #{tpu_custom_call.1} parent=5 // pred_check_branch
        %256 = sbr.rel (%p253) target = $region12
      $region11: #{tpu_custom_call.1} parent=5 // pred_region
        %s257 = ssub.s32 %s23, 1
        // Predicated region
        $region13: #{tpu_custom_call.1} parent=11 // pred_check
          %p258 = pneg %p70
        $region14: #{tpu_custom_call.1} parent=11 // pred_check_branch
          %260 = sbr.rel (%p258) target = $region16
        $region15: #{tpu_custom_call.1} parent=11 // pred_region
          %262 = vsyncadd [#allocation6], 0
          %s263 = sshll.u32 %s1, 4
          %s264 = int_to_ptr.hbm [resolvable:$true] %s263
          %s265 = sshll.u32 [#allocation5], 4
          %s266 = int_to_ptr.vmem [resolvable:$true] %s265
          %271 = dma.hbm_to_vmem [thread:$0]  %s264, 256, %s266, [#allocation6], 64, 64, 4
        $region16: #{tpu_custom_call.1} parent=11 // pred_fallthru
          _
        // Predicated region
        $region17: #{tpu_custom_call.1} parent=11 // pred_check
          %p272 = pneg %p91
        $region18: #{tpu_custom_call.1} parent=11 // pred_check_branch
          %274 = sbr.rel (%p272) target = $region20
        $region19: #{tpu_custom_call.1} parent=11 // pred_region
          _
        $region20: #{tpu_custom_call.1} parent=11 // pred_fallthru
          _
        // Predicated region
        $region21: #{tpu_custom_call.1} parent=11 // pred_check
          %p275 = pneg %p112
        $region22: #{tpu_custom_call.1} parent=11 // pred_check_branch
          %277 = sbr.rel (%p275) target = $region24
        $region23: #{tpu_custom_call.1} parent=11 // pred_region
          %279 = vsyncadd [#allocation6], 0
          %s280 = sshll.u32 %s3, 4
          %s281 = int_to_ptr.hbm [resolvable:$true] %s280
          %s282 = sshll.u32 [#allocation7], 4
          %s283 = int_to_ptr.vmem [resolvable:$true] %s282
          %288 = dma.hbm_to_vmem [thread:$0]  %s281, 256, %s283, [#allocation6], 64, 64, 4
        $region24: #{tpu_custom_call.1} parent=11 // pred_fallthru
          _
        // Predicated region
        $region25: #{tpu_custom_call.1} parent=11 // pred_check
          %p289 = pneg %p133
        $region26: #{tpu_custom_call.1} parent=11 // pred_check_branch
          %291 = sbr.rel (%p289) target = $region28
        $region27: #{tpu_custom_call.1} parent=11 // pred_region
          _
        $region28: #{tpu_custom_call.1} parent=11 // pred_fallthru
          _
        // Predicated region
        $region29: #{tpu_custom_call.1} parent=11 // pred_check
          %p292 = pneg %p154
        $region30: #{tpu_custom_call.1} parent=11 // pred_check_branch
          %294 = sbr.rel (%p292) target = $region32
        $region31: #{tpu_custom_call.1} parent=11 // pred_region
          %296 = vsyncadd [#allocation9], 0
          %s297 = sshll.u32 %s5, 4
          %s298 = int_to_ptr.hbm [resolvable:$true] %s297
          %s299 = sshll.u32 [#allocation8], 4
          %s300 = int_to_ptr.vmem [resolvable:$true] %s299
          %305 = dma.hbm_to_vmem [thread:$0]  %s298, 256, %s300, [#allocation9], 64, 64, 4
        $region32: #{tpu_custom_call.1} parent=11 // pred_fallthru
          _
        // Predicated region
        $region33: #{tpu_custom_call.1} parent=11 // pred_check
          %p306 = pneg %p175
        $region34: #{tpu_custom_call.1} parent=11 // pred_check_branch
          %308 = sbr.rel (%p306) target = $region36
        $region35: #{tpu_custom_call.1} parent=11 // pred_region
          _
        $region36: #{tpu_custom_call.1} parent=11 // pred_fallthru
          _
        // Predicated region
        $region37: #{tpu_custom_call.1} parent=11 // pred_check
          %p309 = pneg %p196
        $region38: #{tpu_custom_call.1} parent=11 // pred_check_branch
          %311 = sbr.rel (%p309) target = $region40
        $region39: #{tpu_custom_call.1} parent=11 // pred_region
          %313 = vsyncadd [#allocation9], 0
          %s314 = sshll.u32 %s7, 4
          %s315 = int_to_ptr.hbm [resolvable:$true] %s314
          %s316 = sshll.u32 [#allocation10], 4
          %s317 = int_to_ptr.vmem [resolvable:$true] %s316
          %322 = dma.hbm_to_vmem [thread:$0]  %s315, 256, %s317, [#allocation9], 64, 64, 4
        $region40: #{tpu_custom_call.1} parent=11 // pred_fallthru
          _
        // Predicated region
        $region41: #{tpu_custom_call.1} parent=11 // pred_check
          %p323 = pneg %p217
        $region42: #{tpu_custom_call.1} parent=11 // pred_check_branch
          %325 = sbr.rel (%p323) target = $region44
        $region43: #{tpu_custom_call.1} parent=11 // pred_region
          _
        $region44: #{tpu_custom_call.1} parent=11 // pred_fallthru
          _
      $region12: #{tpu_custom_call.1} parent=5 // pred_fallthru
        _
      %p326 = scmp.lt.s32.totalorder %s23, 2
      // Predicated region
      $region45: #{tpu_custom_call.1} parent=5 // pred_check
        %p327 = pneg %p326
      $region46: #{tpu_custom_call.1} parent=5 // pred_check_branch
        %329 = sbr.rel (%p327) target = $region48
      $region47: #{tpu_custom_call.1} parent=5 // pred_region
        // Predicated region
        $region49: #{tpu_custom_call.1} parent=47 // pred_check
          %p330 = pneg %p43
        $region50: #{tpu_custom_call.1} parent=47 // pred_check_branch
          %332 = sbr.rel (%p330) target = $region52
        $region51: #{tpu_custom_call.1} parent=47 // pred_region
          %s333 = sand.u32 %s33, 1
          %s334 = scalar_lea.sflag [#allocation3], %s333
          %s335 = sand.u32 %s33, 1
          %s336 = smul.addr %s335, 8
          %s337 = scalar_lea.vmem [#allocation2], %s336
          %339 = vsyncadd %s334, 0
          %s340 = smul.addr %s23, 8
          %s341 = scalar_lea.hbm %s0, %s340
          %s343 = sshll.u32 %s341, 4
          %s344 = int_to_ptr.hbm [resolvable:$true] %s343
          %s345 = sshll.u32 %s337, 4
          %s346 = int_to_ptr.vmem [resolvable:$true] %s345
          %348 = dma.hbm_to_vmem [thread:$0]  %s344, 128, %s346, %s334
        $region52: #{tpu_custom_call.1} parent=47 // pred_fallthru
          _
      $region48: #{tpu_custom_call.1} parent=5 // pred_fallthru
        _
      %p349 = scmp.le.s32.totalorder 1, %s23
      %p350 = scmp.lt.s32.totalorder %s23, 3
      %p351 = pnand %p349, %p350
      %p352 = pneg %p351
      // Predicated region
      $region53: #{tpu_custom_call.1} parent=5 // pred_check
        _
      $region54: #{tpu_custom_call.1} parent=5 // pred_check_branch
        %354 = sbr.rel (%p351) target = $region56
      $region55: #{tpu_custom_call.1} parent=5 // pred_region
        %s355 = ssub.s32 %s23, 1
        %s356 = sand.u32 %s36, 1
        %s357 = scalar_lea.sflag [#allocation3], %s356
        %s358 = sand.u32 %s36, 1
        %s359 = smul.addr %s358, 8
        %s360 = scalar_lea.vmem [#allocation2], %s359
        // Predicated region
        $region57: #{tpu_custom_call.1} parent=55 // pred_check
          %p361 = pneg %p49
        $region58: #{tpu_custom_call.1} parent=55 // pred_check_branch
          %363 = sbr.rel (%p361) target = $region60
        $region59: #{tpu_custom_call.1} parent=55 // pred_region
          %365 = dma.done %s357, 128
        $region60: #{tpu_custom_call.1} parent=55 // pred_fallthru
          _
        // Predicated region
        $region61: #{tpu_custom_call.1} parent=55 // pred_check
          %p366 = pneg %p70
        $region62: #{tpu_custom_call.1} parent=55 // pred_check_branch
          %368 = sbr.rel (%p366) target = $region64
        $region63: #{tpu_custom_call.1} parent=55 // pred_region
          %370 = dma.done [#allocation6], 256
        $region64: #{tpu_custom_call.1} parent=55 // pred_fallthru
          _
        // Predicated region
        $region65: #{tpu_custom_call.1} parent=55 // pred_check
          %p371 = pneg %p112
        $region66: #{tpu_custom_call.1} parent=55 // pred_check_branch
          %373 = sbr.rel (%p371) target = $region68
        $region67: #{tpu_custom_call.1} parent=55 // pred_region
          %375 = dma.done [#allocation6], 256
        $region68: #{tpu_custom_call.1} parent=55 // pred_fallthru
          _
        // Predicated region
        $region69: #{tpu_custom_call.1} parent=55 // pred_check
          %p376 = pneg %p154
        $region70: #{tpu_custom_call.1} parent=55 // pred_check_branch
          %378 = sbr.rel (%p376) target = $region72
        $region71: #{tpu_custom_call.1} parent=55 // pred_region
          %380 = dma.done [#allocation9], 256
        $region72: #{tpu_custom_call.1} parent=55 // pred_fallthru
          _
        // Predicated region
        $region73: #{tpu_custom_call.1} parent=55 // pred_check
          %p381 = pneg %p196
        $region74: #{tpu_custom_call.1} parent=55 // pred_check_branch
          %383 = sbr.rel (%p381) target = $region76
        $region75: #{tpu_custom_call.1} parent=55 // pred_region
          %385 = dma.done [#allocation9], 256
        $region76: #{tpu_custom_call.1} parent=55 // pred_fallthru
          _
        %s386 = sand.u32 %s36, 1
        %s387 = scalar_lea.sflag [#allocation3], %s386
        %s388 = sand.u32 %s36, 1
        %s389 = smul.addr %s388, 8
        %s390 = scalar_lea.vmem [#allocation2], %s389
        %p391 = pneg %p49
        %p392 = pneg %p46
        %p393 = pneg %p70
        %p394 = pneg %p67
        %p395 = pneg %p91
        %p396 = pneg %p88
        %p397 = pneg %p112
        %p398 = pneg %p109
        %p399 = pneg %p133
        %p400 = pneg %p130
        %p401 = pneg %p154
        %p402 = pneg %p151
        %p403 = pneg %p175
        %p404 = pneg %p172
        %p405 = pneg %p196
        %p406 = pneg %p193
        %p407 = pneg %p217
        %p408 = pneg %p214
        %p409 = pneg %p243
        %p410 = pneg %p240
        %s411 = sand.u32 %s230, 1
        %s412 = scalar_lea.sflag [#allocation4], %s411
        %s413 = sand.u32 %s230, 1
        %s414 = smul.addr %s413, 8
        %s415 = scalar_lea.vmem [#allocation11], %s414
        %v417 = vld [vmem:[%s360] sm:$0xff]
        %v418 = vpack.c.bf16 %v417, %v417
        %v419 = vld [vmem:[#allocation5] sm:$0xf]
        %v420 = vld [vmem:[#allocation5 + $0x4] sm:$0xf]
        %v421 = vld [vmem:[#allocation5 + $0x8] sm:$0xf]
        %v422 = vld [vmem:[#allocation5 + $0xc] sm:$0xf]
        %v423 = vld [vmem:[%s2] sm:$0x1]
        %v425 = vperm.slane %v423, 0
        %v431 = vunpack.c.l.b16 %v419
        %v432 = vunpack.c.l.b16 %v420
        %v433 = vunpack.c.l.b16 %v421
        %v434 = vunpack.c.l.b16 %v422
        %v435 = vpack.c.b16 %v432, %v431
        %v436 = vpack.c.b16 %v434, %v433
        %vm439 = vcmask 261120
        %v441 = vsel %vm439, %v418, 0
        %443 = vmatpush.bf16.msra.mxu0 0
        %444 = vmatpush.bf16.msra.mxu0 0
        %445 = vmatpush.bf16.msra.mxu0 0
        %446 = vmatpush.bf16.msra.mxu0 0
        %447 = vmatpush.bf16.msra.mxu0 0
        %448 = vmatpush.bf16.msra.mxu0 0
        %449 = vmatpush.bf16.msra.mxu0 %v436
        %450 = vmatpush.bf16.msra.mxu0 %v435
        %451 = vmatmul.bf16.gmra.mxu0 %v441
        %v452 = vpop.f32.mrf.mxu0
        %v453 = vadd.f32 %v425, %v452
        %v454 = vpop.f32.mrf.mxu0
        %455 = vdwg.mxu0
        %v456 = vld [vmem:[#allocation7] sm:$0xf]
        %v457 = vld [vmem:[#allocation7 + $0x4] sm:$0xf]
        %v458 = vld [vmem:[#allocation7 + $0x8] sm:$0xf]
        %v459 = vld [vmem:[#allocation7 + $0xc] sm:$0xf]
        %v460 = vld [vmem:[%s4] sm:$0x1]
        %v462 = vperm.slane %v460, 0
        %v468 = vunpack.c.l.b16 %v456
        %v469 = vunpack.c.l.b16 %v457
        %v470 = vunpack.c.l.b16 %v458
        %v471 = vunpack.c.l.b16 %v459
        %v472 = vpack.c.b16 %v469, %v468
        %v473 = vpack.c.b16 %v471, %v470
        %476 = vmatpush.bf16.msra.mxu0 0
        %477 = vmatpush.bf16.msra.mxu0 0
        %478 = vmatpush.bf16.msra.mxu0 0
        %479 = vmatpush.bf16.msra.mxu0 0
        %480 = vmatpush.bf16.msra.mxu0 0
        %481 = vmatpush.bf16.msra.mxu0 0
        %482 = vmatpush.bf16.msra.mxu0 %v473
        %483 = vmatpush.bf16.msra.mxu0 %v472
        %484 = vmatmul.bf16.gmra.mxu0 %v441
        %v485 = vpop.f32.mrf.mxu0
        %v486 = vadd.f32 %v462, %v485
        %v487 = vpop.f32.mrf.mxu0
        %488 = vdwg.mxu0
        %v489 = vld [vmem:[#allocation8] sm:$0xf]
        %v490 = vld [vmem:[#allocation8 + $0x4] sm:$0xf]
        %v491 = vld [vmem:[#allocation8 + $0x8] sm:$0xf]
        %v492 = vld [vmem:[#allocation8 + $0xc] sm:$0xf]
        %v493 = vld [vmem:[%s6] sm:$0x1]
        %v495 = vperm.slane %v493, 0
        %v501 = vunpack.c.l.b16 %v489
        %v502 = vunpack.c.l.b16 %v490
        %v503 = vunpack.c.l.b16 %v491
        %v504 = vunpack.c.l.b16 %v492
        %v505 = vpack.c.b16 %v502, %v501
        %v506 = vpack.c.b16 %v504, %v503
        %509 = vmatpush.bf16.msra.mxu0 0
        %510 = vmatpush.bf16.msra.mxu0 0
        %511 = vmatpush.bf16.msra.mxu0 0
        %512 = vmatpush.bf16.msra.mxu0 0
        %513 = vmatpush.bf16.msra.mxu0 0
        %514 = vmatpush.bf16.msra.mxu0 0
        %515 = vmatpush.bf16.msra.mxu0 %v506
        %516 = vmatpush.bf16.msra.mxu0 %v505
        %517 = vmatmul.bf16.gmra.mxu0 %v441
        %v518 = vpop.f32.mrf.mxu0
        %v519 = vadd.f32 %v495, %v518
        %v520 = vpop.f32.mrf.mxu0
        %521 = vdwg.mxu0
        %v522 = vpack.c.bf16 %v453, %v453
        %v523 = vpack.c.bf16 %v486, %v486
        %v524 = vpack.c.bf16 %v519, %v519
        %vm525 = vcmask 64512
        %v527 = vsel %vm525, %v522, 0
        %v530 = vsel %vm525, %v523, 0
        %532 = vmatpush.bf16.xpose.msra.mxu0 0
        %533 = vmatpush.bf16.xpose.msra.mxu0 0
        %534 = vmatpush.bf16.xpose.msra.mxu0 0
        %535 = vmatpush.bf16.xpose.msra.mxu0 0
        %536 = vmatpush.bf16.xpose.msra.mxu0 0
        %537 = vmatpush.bf16.xpose.msra.mxu0 0
        %538 = vmatpush.bf16.xpose.msra.mxu0 0
        %539 = vmatpush.bf16.xpose.msra.mxu0 %v530
        %540 = vmatmul.bf16.gmra.mxu0 %v527
        %v541 = vpop.f32.mrf.mxu0
        %v542 = vadd.f32 0.0, %v541
        %v543 = vpop.f32.mrf.mxu0
        %544 = vdwg.mxu0
        %v545 = vsel %vm525, %v542, -inf
        %546 = vmax.xlane.f32.xlu0 %v545
        %v547 = vpop.xlane.xlu0 %546
        %v548 = vsub.f32 %v542, %v547
        %v549 = vmul.f32 %v548, 1.442695
        %v550 = vpow.pop %v549
        %v551 = vsel %vm525, %v550, 0.0
        %552 = vadd.xlane.f32.xlu0 %v551
        %v553 = vpop.xlane.xlu0 %552
        %v554 = vrcp.pop %v553
        %v555 = vmul.f32 %v553, %v554
        %v556 = vsub.f32 2.0, %v555
        %v557 = vmul.f32 %v554, %v556
        %v558 = vmul.f32 %v550, %v557
        %v559 = vpack.c.bf16 %v558, %v558
        %v561 = vsel %vm525, %v559, 0
        %vm563 = vcmask 1043456
        %v565 = vsel %vm563, %v524, 0
        %567 = vmatpush.bf16.msra.mxu0 0
        %568 = vmatpush.bf16.msra.mxu0 0
        %569 = vmatpush.bf16.msra.mxu0 0
        %570 = vmatpush.bf16.msra.mxu0 0
        %571 = vmatpush.bf16.msra.mxu0 0
        %572 = vmatpush.bf16.msra.mxu0 0
        %573 = vmatpush.bf16.msra.mxu0 0
        %574 = vmatpush.bf16.msra.mxu0 %v565
        %575 = vmatmul.bf16.gmra.mxu0 %v561
        %v576 = vpop.f32.mrf.mxu0
        %v577 = vadd.f32 0.0, %v576
        %v578 = vpop.f32.mrf.mxu0
        %579 = vdwg.mxu0
        %v581 = vunpack.c.l.b16 %v522
        %v582 = vpack.c.b16 %v581, %v581
        %583 = vrot.lane.b32.xlu0 %v582, 120
        %v584 = vpop.permute.xlu0 %583
        %v586 = vunpack.c.l.b16 %v523
        %v587 = vpack.c.b16 %v586, %v586
        %588 = vrot.lane.b32.xlu0 %v587, 120
        %v589 = vpop.permute.xlu0 %588
        %v591 = vsel %vm525, %v584, 0
        %v594 = vsel %vm525, %v589, 0
        %596 = vmatpush.bf16.xpose.msra.mxu0 0
        %597 = vmatpush.bf16.xpose.msra.mxu0 0
        %598 = vmatpush.bf16.xpose.msra.mxu0 0
        %599 = vmatpush.bf16.xpose.msra.mxu0 0
        %600 = vmatpush.bf16.xpose.msra.mxu0 0
        %601 = vmatpush.bf16.xpose.msra.mxu0 0
        %602 = vmatpush.bf16.xpose.msra.mxu0 0
        %603 = vmatpush.bf16.xpose.msra.mxu0 %v594
        %604 = vmatmul.bf16.gmra.mxu0 %v591
        %v605 = vpop.f32.mrf.mxu0
        %v606 = vadd.f32 0.0, %v605
        %v607 = vpop.f32.mrf.mxu0
        %608 = vdwg.mxu0
        %v609 = vsel %vm525, %v606, -inf
        %610 = vmax.xlane.f32.xlu0 %v609
        %v611 = vpop.xlane.xlu0 %610
        %v612 = vsub.f32 %v606, %v611
        %v613 = vmul.f32 %v612, 1.442695
        %v614 = vpow.pop %v613
        %v615 = vsel %vm525, %v614, 0.0
        %616 = vadd.xlane.f32.xlu0 %v615
        %v617 = vpop.xlane.xlu0 %616
        %v618 = vrcp.pop %v617
        %v619 = vmul.f32 %v617, %v618
        %v620 = vsub.f32 2.0, %v619
        %v621 = vmul.f32 %v618, %v620
        %v622 = vmul.f32 %v614, %v621
        %v623 = vpack.c.bf16 %v622, %v622
        %v625 = vunpack.c.l.b16 %v524
        %v626 = vpack.c.b16 %v625, %v625
        %627 = vrot.lane.b32.xlu0 %v626, 120
        %v628 = vpop.permute.xlu0 %627
        %v630 = vsel %vm525, %v623, 0
        %v633 = vsel %vm563, %v628, 0
        %635 = vmatpush.bf16.msra.mxu0 0
        %636 = vmatpush.bf16.msra.mxu0 0
        %637 = vmatpush.bf16.msra.mxu0 0
        %638 = vmatpush.bf16.msra.mxu0 0
        %639 = vmatpush.bf16.msra.mxu0 0
        %640 = vmatpush.bf16.msra.mxu0 0
        %641 = vmatpush.bf16.msra.mxu0 0
        %642 = vmatpush.bf16.msra.mxu0 %v633
        %643 = vmatmul.bf16.gmra.mxu0 %v630
        %v644 = vpop.f32.mrf.mxu0
        %v645 = vadd.f32 0.0, %v644
        %v646 = vpop.f32.mrf.mxu0
        %647 = vdwg.mxu0
        %648 = vrot.lane.b32.xlu0 %v582, 112
        %v649 = vpop.permute.xlu0 %648
        %650 = vrot.lane.b32.xlu0 %v587, 112
        %v651 = vpop.permute.xlu0 %650
        %v653 = vsel %vm525, %v649, 0
        %v656 = vsel %vm525, %v651, 0
        %658 = vmatpush.bf16.xpose.msra.mxu0 0
        %659 = vmatpush.bf16.xpose.msra.mxu0 0
        %660 = vmatpush.bf16.xpose.msra.mxu0 0
        %661 = vmatpush.bf16.xpose.msra.mxu0 0
        %662 = vmatpush.bf16.xpose.msra.mxu0 0
        %663 = vmatpush.bf16.xpose.msra.mxu0 0
        %664 = vmatpush.bf16.xpose.msra.mxu0 0
        %665 = vmatpush.bf16.xpose.msra.mxu0 %v656
        %666 = vmatmul.bf16.gmra.mxu0 %v653
        %v667 = vpop.f32.mrf.mxu0
        %v668 = vadd.f32 0.0, %v667
        %v669 = vpop.f32.mrf.mxu0
        %670 = vdwg.mxu0
        %v671 = vsel %vm525, %v668, -inf
        %672 = vmax.xlane.f32.xlu0 %v671
        %v673 = vpop.xlane.xlu0 %672
        %v674 = vsub.f32 %v668, %v673
        %v675 = vmul.f32 %v674, 1.442695
        %v676 = vpow.pop %v675
        %v677 = vsel %vm525, %v676, 0.0
        %678 = vadd.xlane.f32.xlu0 %v677
        %v679 = vpop.xlane.xlu0 %678
        %v680 = vrcp.pop %v679
        %v681 = vmul.f32 %v679, %v680
        %v682 = vsub.f32 2.0, %v681
        %v683 = vmul.f32 %v680, %v682
        %v684 = vmul.f32 %v676, %v683
        %v685 = vpack.c.bf16 %v684, %v684
        %686 = vrot.lane.b32.xlu0 %v626, 112
        %v687 = vpop.permute.xlu0 %686
        %v689 = vsel %vm525, %v685, 0
        %v692 = vsel %vm563, %v687, 0
        %694 = vmatpush.bf16.msra.mxu0 0
        %695 = vmatpush.bf16.msra.mxu0 0
        %696 = vmatpush.bf16.msra.mxu0 0
        %697 = vmatpush.bf16.msra.mxu0 0
        %698 = vmatpush.bf16.msra.mxu0 0
        %699 = vmatpush.bf16.msra.mxu0 0
        %700 = vmatpush.bf16.msra.mxu0 0
        %701 = vmatpush.bf16.msra.mxu0 %v692
        %702 = vmatmul.bf16.gmra.mxu0 %v689
        %v703 = vpop.f32.mrf.mxu0
        %v704 = vadd.f32 0.0, %v703
        %v705 = vpop.f32.mrf.mxu0
        %706 = vdwg.mxu0
        %707 = vrot.lane.b32.xlu0 %v582, 104
        %v708 = vpop.permute.xlu0 %707
        %709 = vrot.lane.b32.xlu0 %v587, 104
        %v710 = vpop.permute.xlu0 %709
        %v712 = vsel %vm525, %v708, 0
        %v715 = vsel %vm525, %v710, 0
        %717 = vmatpush.bf16.xpose.msra.mxu0 0
        %718 = vmatpush.bf16.xpose.msra.mxu0 0
        %719 = vmatpush.bf16.xpose.msra.mxu0 0
        %720 = vmatpush.bf16.xpose.msra.mxu0 0
        %721 = vmatpush.bf16.xpose.msra.mxu0 0
        %722 = vmatpush.bf16.xpose.msra.mxu0 0
        %723 = vmatpush.bf16.xpose.msra.mxu0 0
        %724 = vmatpush.bf16.xpose.msra.mxu0 %v715
        %725 = vmatmul.bf16.gmra.mxu0 %v712
        %v726 = vpop.f32.mrf.mxu0
        %v727 = vadd.f32 0.0, %v726
        %v728 = vpop.f32.mrf.mxu0
        %729 = vdwg.mxu0
        %v730 = vsel %vm525, %v727, -inf
        %731 = vmax.xlane.f32.xlu0 %v730
        %v732 = vpop.xlane.xlu0 %731
        %v733 = vsub.f32 %v727, %v732
        %v734 = vmul.f32 %v733, 1.442695
        %v735 = vpow.pop %v734
        %v736 = vsel %vm525, %v735, 0.0
        %737 = vadd.xlane.f32.xlu0 %v736
        %v738 = vpop.xlane.xlu0 %737
        %v739 = vrcp.pop %v738
        %v740 = vmul.f32 %v738, %v739
        %v741 = vsub.f32 2.0, %v740
        %v742 = vmul.f32 %v739, %v741
        %v743 = vmul.f32 %v735, %v742
        %v744 = vpack.c.bf16 %v743, %v743
        %745 = vrot.lane.b32.xlu0 %v626, 104
        %v746 = vpop.permute.xlu0 %745
        %v748 = vsel %vm525, %v744, 0
        %v751 = vsel %vm563, %v746, 0
        %753 = vmatpush.bf16.msra.mxu0 0
        %754 = vmatpush.bf16.msra.mxu0 0
        %755 = vmatpush.bf16.msra.mxu0 0
        %756 = vmatpush.bf16.msra.mxu0 0
        %757 = vmatpush.bf16.msra.mxu0 0
        %758 = vmatpush.bf16.msra.mxu0 0
        %759 = vmatpush.bf16.msra.mxu0 0
        %760 = vmatpush.bf16.msra.mxu0 %v751
        %761 = vmatmul.bf16.gmra.mxu0 %v748
        %v762 = vpop.f32.mrf.mxu0
        %v763 = vadd.f32 0.0, %v762
        %v764 = vpop.f32.mrf.mxu0
        %765 = vdwg.mxu0
        %767 = vrot.lane.b32.xlu0 %v645, 8
        %v768 = vpop.permute.xlu0 %767
        %771 = vrot.lane.b32.xlu0 %v704, 16
        %v772 = vpop.permute.xlu0 %771
        %775 = vrot.lane.b32.xlu0 %v763, 24
        %v776 = vpop.permute.xlu0 %775
        %v778 = vsel %vm525, %v577, %v768
        %vm779 = vcmask 130048
        %v780 = vsel %vm779, %v778, %v772
        %vm781 = vcmask 195584
        %v782 = vsel %vm781, %v780, %v776
        %v783 = vpack.c.bf16 %v782, %v782
        %v784 = vld [vmem:[#allocation10] sm:$0xf]
        %v785 = vld [vmem:[#allocation10 + $0x4] sm:$0xf]
        %v786 = vld [vmem:[#allocation10 + $0x8] sm:$0xf]
        %v787 = vld [vmem:[#allocation10 + $0xc] sm:$0xf]
        %v788 = vld [vmem:[%s8] sm:$0x1]
        %v790 = vperm.slane %v788, 0
        %v796 = vunpack.c.l.b16 %v784
        %v797 = vunpack.c.l.b16 %v785
        %v798 = vunpack.c.l.b16 %v786
        %v799 = vunpack.c.l.b16 %v787
        %v800 = vpack.c.b16 %v797, %v796
        %v801 = vpack.c.b16 %v799, %v798
        %v805 = vsel %vm439, %v783, 0
        %807 = vmatpush.bf16.msra.mxu0 0
        %808 = vmatpush.bf16.msra.mxu0 0
        %809 = vmatpush.bf16.msra.mxu0 0
        %810 = vmatpush.bf16.msra.mxu0 0
        %811 = vmatpush.bf16.msra.mxu0 0
        %812 = vmatpush.bf16.msra.mxu0 0
        %813 = vmatpush.bf16.msra.mxu0 %v801
        %814 = vmatpush.bf16.msra.mxu0 %v800
        %815 = vmatmul.bf16.gmra.mxu0 %v805
        %v816 = vpop.f32.mrf.mxu0
        %v817 = vadd.f32 %v790, %v816
        %v818 = vpop.f32.mrf.mxu0
        %819 = vdwg.mxu0
        %820 = vst.msk [vmem:[%s415] sm:$0xff] %vm439, %v817
        %s821 = sand.u32 %s230, 1
        %s822 = scalar_lea.sflag [#allocation4], %s821
        %s823 = sand.u32 %s230, 1
        %s824 = smul.addr %s823, 8
        %s825 = scalar_lea.vmem [#allocation11], %s824
        // Predicated region
        $region77: #{tpu_custom_call.1} parent=55 // pred_check
          %p826 = pneg %p240
        $region78: #{tpu_custom_call.1} parent=55 // pred_check_branch
          %828 = sbr.rel (%p826) target = $region80
        $region79: #{tpu_custom_call.1} parent=55 // pred_region
          %830 = vsyncadd %s822, 0
          %s831 = smul.addr %s28, 8
          %s832 = scalar_lea.hbm %s9, %s831
          %s834 = sshll.u32 %s825, 4
          %s835 = int_to_ptr.vmem [resolvable:$true] %s834
          %s836 = sshll.u32 %s832, 4
          %s837 = int_to_ptr.hbm [resolvable:$true] %s836
          %839 = dma.vmem_to_hbm [thread:$0]  %s835, 128, %s837, %s822
        $region80: #{tpu_custom_call.1} parent=55 // pred_fallthru
          _
      $region56: #{tpu_custom_call.1} parent=5 // pred_fallthru
        _
      %p840 = scmp.le.s32.totalorder 2, %s23
      // Predicated region
      $region81: #{tpu_custom_call.1} parent=5 // pred_check
        %p841 = pneg %p840
      $region82: #{tpu_custom_call.1} parent=5 // pred_check_branch
        %843 = sbr.rel (%p841) target = $region84
      $region83: #{tpu_custom_call.1} parent=5 // pred_region
        %s844 = ssub.s32 %s23, 2
        // Predicated region
        $region85: #{tpu_custom_call.1} parent=83 // pred_check
          %p845 = pneg %p246
        $region86: #{tpu_custom_call.1} parent=83 // pred_check_branch
          %847 = sbr.rel (%p845) target = $region88
        $region87: #{tpu_custom_call.1} parent=83 // pred_region
          %s848 = sand.u32 %s231, 1
          %s849 = scalar_lea.sflag [#allocation4], %s848
          %s850 = sand.u32 %s231, 1
          %s851 = smul.addr %s850, 8
          %s852 = scalar_lea.vmem [#allocation11], %s851
          %854 = dma.done %s849, 128
        $region88: #{tpu_custom_call.1} parent=83 // pred_fallthru
          _
      $region84: #{tpu_custom_call.1} parent=5 // pred_fallthru
        _
    $region6: #{tpu_custom_call.1} parent=1 // loop_footer
      %s27 = sadd.s32 1, %s23
    $region7: #{tpu_custom_call.1} parent=1 // loop_footer_branch
      %22 = sbr.rel target = $region3
    $region8: #{tpu_custom_call.1} parent=1 // loop_exit
      _
    %855 = vsyncpa [#allocation3], 1
    %s856 = scalar_lea.sflag [#allocation3], 1
    %857 = vsyncpa %s856, 1
    %858 = vsyncpa [#allocation6], 1
    %859 = vsyncpa [#allocation9], 1
    %860 = vsyncpa [#allocation4], 1
    %s861 = scalar_lea.sflag [#allocation4], 1
    %862 = vsyncpa %s861, 1

</llo_original>
